<compile_context>
chip_gen: v7x
topology: tpu7x:2x2x1
jax: 0.10.0
libtpu: 0.0.40
codegen_flags: <defaults>
</compile_context>

<pallas_src>
import functools
import math

import jax
import jax.numpy as jnp
from jax.experimental import pallas as pl
from jax.experimental.pallas import tpu as pltpu


# --------------------------------------------------------------------------
# Kernels
# --------------------------------------------------------------------------
def _gat_project_kernel(x_ref, w_ref, a_cat_ref, h_ref, proj_ref):
    """Runs once: h = x @ W and the fused, lane-dense attention projections."""
    h = jnp.dot(x_ref[...], w_ref[...], preferred_element_type=jnp.float32)
    h_cast = h.astype(h_ref.dtype)                 # bf16 on the MXU-native path
    h_ref[...] = h_cast
    # Single matmul against [a_self | a_neighs | zeros] padded to 128 lanes so the
    # proj store is an unmasked, lane-dense write (was a lane-width-2 output).
    proj_ref[...] = jnp.dot(h_cast, a_cat_ref[...],
                            preferred_element_type=jnp.float32)


def _gat_attend_kernel(h_ref, as_ref, an_ref, adj_ref, m_ref, out_ref, *,
                       alpha, concat):
    """One (tq, N) row tile: masked row-softmax attention + (attention @ h)."""
    # logits[i, j] = a_self.h_i + a_neighs.h_j : (tq, 1) + (1, N) -> (tq, N), f32.
    logits = as_ref[...].astype(jnp.float32) + an_ref[...].astype(jnp.float32)
    logits = logits * m_ref[...].astype(jnp.float32)
    # LeakyReLU(alpha): for 0 <= alpha <= 1 this is exactly max(x, alpha*x).
    if 0.0 <= alpha <= 1.0:
        logits = jnp.maximum(logits, alpha * logits)
    else:
        logits = jnp.where(logits > 0, logits, alpha * logits)
    # Non-edges -> huge negative.  Must stay f32 (-9e15 overflows bf16).
    logits = jnp.where(adj_ref[...] > 0, logits, -9e15)
    # Row softmax: the full row lives in this tile -> no online-softmax state.
    logits = logits - jnp.max(logits, axis=1, keepdims=True)
    e = jnp.exp(logits)
    denom = jnp.sum(e, axis=1, keepdims=True)                    # (tq, 1)
    # Deferred normalisation: matmul the *unnormalised* exponentials on the MXU,
    # then scale the small (tq, F_out) result with an exact reciprocal.
    hp = jnp.dot(e.astype(h_ref.dtype), h_ref[...],
                 preferred_element_type=jnp.float32)
    h_prime = hp * pl.reciprocal(denom, approx=False)
    if concat:
        # ELU.  min() keeps the unselected branch finite.
        # TODO(synk): use jnp.expm1 (bit-exact vs jax.nn.elu) once expm1 lowering
        # is guaranteed on every TPU generation; exp() is safe everywhere.
        h_prime = jnp.where(h_prime > 0, h_prime,
                            jnp.exp(jnp.minimum(h_prime, 0.0)) - 1.0)
    out_ref[...] = h_prime.astype(out_ref.dtype)


# --------------------------------------------------------------------------
# Wrapper helpers
# --------------------------------------------------------------------------
def _round_up(x, m):
    return (x + m - 1) // m * m


def _vmem_limit_bytes():
    """Scoped-VMEM limit derived from the chip: ~48 MiB on v7x, ~96 MiB v5e/v6e."""
    cap = None
    try:
        cap = getattr(pltpu.get_tpu_info(), "vmem_capacity_bytes", None)
    except Exception:
        cap = None
    if not cap:
        cap = 64 * 1024 * 1024            # conservative (v7x-sized) fallback
    return int(min(cap * 3 // 4, 96 * 1024 * 1024))


def _single_buffer_spec(shape, index_map):
    """Grid-constant block: single-buffer it (double-buffering just wastes VMEM)."""
    try:
        return pl.BlockSpec(shape, index_map, pipeline_mode=pl.Buffered(1))
    except Exception:                      # older API without pipeline_mode
        return pl.BlockSpec(shape, index_map)


def _pick_row_tile(n, f_out, h_itemsize, adj_itemsize, m_itemsize, vmem_limit):
    """Largest MXU-friendly row tile whose full footprint fits the VMEM budget."""
    # Grid-constant residents (worst case: still double-buffered): h + a_neighs row.
    resident = 2 * (n * f_out * h_itemsize + n * 4)
    # Per-row bytes: adj/M double buffers + ~2 f32 (tq, n) temps (logits / e)
    # + output & a_self-column double buffers.
    per_row = n * (2 * adj_itemsize + 2 * m_itemsize + 2 * 4) + 2 * f_out * 4 + 8
    budget = vmem_limit * 3 // 4                    # headroom for Mosaic scratch
    cap = max(8, (budget - resident) // per_row)
    tq = min(512, cap)
    if n >= 256:                                    # keep >= 2 tiles for megacore
        tq = min(tq, max(128, (n // 2) // 128 * 128))
    for align in (256, 128, 8):                     # MXU-friendly M dimension
        if tq >= align:
            tq = tq // align * align
            break
    return int(max(8, min(tq, _round_up(n, 8))))


# --------------------------------------------------------------------------
# Forward pass
# --------------------------------------------------------------------------
def graph_attention_layer(x, adj, M, W, a_self, a_neighs, *, alpha, concat=True,
                          row_tile=None, out_dtype=jnp.float32,
                          matmul_dtype=jnp.bfloat16,
                          m_stream_dtype=jnp.bfloat16):
    N, _ = x.shape
    F_out = W.shape[1]
    vmem_limit = _vmem_limit_bytes()

    # ---- stream compression: adj -> int8 predicate, M -> bf16 -----------------
    adj_s = (adj > 0).astype(jnp.int8)
    M_s = M.astype(m_stream_dtype)

    # ---- prologue: h = x @ W and fused lane-dense attention projections -------
    a_cat = jnp.concatenate([a_self, a_neighs], axis=1)            # (F_out, 2)
    a_cat = jnp.pad(a_cat, ((0, 0), (0, 126))).astype(matmul_dtype)  # (F_out, 128)
    h, proj = pl.pallas_call(
        _gat_project_kernel,
        out_shape=(jax.ShapeDtypeStruct((N, F_out), matmul_dtype),
                   jax.ShapeDtypeStruct((N, 128), jnp.float32)),
        in_specs=[pl.BlockSpec(memory_space=pltpu.MemorySpace.VMEM)] * 3,
        out_specs=(pl.BlockSpec(memory_space=pltpu.MemorySpace.VMEM),
                   pl.BlockSpec(memory_space=pltpu.MemorySpace.VMEM)),
        compiler_params=pltpu.CompilerParams(vmem_limit_bytes=vmem_limit),
    )(x.astype(matmul_dtype), W.astype(matmul_dtype), a_cat)

    # Layout plumbing between the two kernels (plain XLA, size O(N)):
    as_col = proj[:, 0:1]        # (N, 1): a_self . h_i   (row-tiled)
    an_row = proj[:, 1:2].T      # (1, N): a_neighs . h_j (VMEM-resident)

    # ---- row tile selection + padding (never fall back to a single tile) ------
    if row_tile is None:
        tq = _pick_row_tile(N, F_out, jnp.dtype(matmul_dtype).itemsize,
                            1, jnp.dtype(m_stream_dtype).itemsize, vmem_limit)
    else:
        tq = max(8, _round_up(int(row_tile), 8))
    Np = _round_up(N, tq)
    if Np != N:
        pad = Np - N
        h = jnp.pad(h, ((0, pad), (0, 0)))
        as_col = jnp.pad(as_col, ((0, pad), (0, 0)))
        an_row = jnp.pad(an_row, ((0, 0), (0, pad)))
        adj_s = jnp.pad(adj_s, ((0, pad), (0, pad)))   # padded cols are masked out
        M_s = jnp.pad(M_s, ((0, pad), (0, pad)))
    grid = (Np // tq,)

    cost = pl.CostEstimate(
        flops=2 * Np * Np * F_out + 10 * Np * Np,
        transcendentals=Np * Np + Np * F_out,
        bytes_accessed=int(Np * Np * (adj_s.dtype.itemsize + M_s.dtype.itemsize)
                           + Np * F_out * (h.dtype.itemsize
                                           + jnp.dtype(out_dtype).itemsize)
                           + Np * 8),
    )

    kernel = functools.partial(_gat_attend_kernel,
                               alpha=float(alpha), concat=bool(concat))
    out = pl.pallas_call(
        kernel,
        out_shape=jax.ShapeDtypeStruct((Np, F_out), out_dtype),
        grid=grid,
        in_specs=[
            _single_buffer_spec((Np, F_out), lambda i: (0, 0)),  # h: resident
            pl.BlockSpec((tq, 1), lambda i: (i, 0)),             # a_self . h_i
            _single_buffer_spec((1, Np), lambda i: (0, 0)),      # a_neighs . h_j
            pl.BlockSpec((tq, Np), lambda i: (i, 0)),            # adj tile (int8)
            pl.BlockSpec((tq, Np), lambda i: (i, 0)),            # M tile (bf16)
        ],
        out_specs=pl.BlockSpec((tq, F_out), lambda i: (i, 0)),
        compiler_params=pltpu.CompilerParams(
            dimension_semantics=("parallel",),
            vmem_limit_bytes=vmem_limit,
        ),
        cost_estimate=cost,
    )(h, as_col, an_row, adj_s, M_s)

    return out if Np == N else out[:N]


def _kaiming_uniform(key, shape, fan, a=0.0):
    # PyTorch kaiming_uniform_ with nonlinearity='leaky_relu'.
    gain = math.sqrt(2.0 / (1.0 + a * a))
    bound = gain * math.sqrt(3.0 / fan)
    return jax.random.uniform(key, shape, jnp.float32, -bound, bound)


if __name__ == "__main__":
    # Small GAT: N=256 nodes, F_in=64, F_out=128 (lane-dense output), alpha=0.2.
    N, F_in, F_out = 256, 64, 128
    alpha = 0.2

    key = jax.random.PRNGKey(0)
    k_x, k_adj, k_m, k_w, k_as, k_an = jax.random.split(key, 6)

    x = jax.random.normal(k_x, (N, F_in), jnp.float32)
    adj = (jax.random.uniform(k_adj, (N, N)) > 0.7).astype(jnp.float32)
    adj = jnp.maximum(adj, jnp.eye(N, dtype=jnp.float32))     # self loops
    M = jax.random.uniform(k_m, (N, N), jnp.float32)

    # Deterministic init mimicking the PyTorch module (fan_out of a 2-D weight
    # in torch is size(0)).
    W = _kaiming_uniform(k_w, (F_in, F_out), fan=F_in)
    a_self = _kaiming_uniform(k_as, (F_out, 1), fan=F_out)
    a_neighs = _kaiming_uniform(k_an, (F_out, 1), fan=F_out)

    # Pure-JAX f32 reference (faithful to the PyTorch forward).
    h_ref = x @ W
    attn = (h_ref @ a_self) + (h_ref @ a_neighs).T
    attn = attn * M
    attn = jnp.where(attn > 0, attn, alpha * attn)
    logits = jnp.where(adj > 0, attn, -9e15)
    attention = jax.nn.softmax(logits, axis=1)
    ref = jax.nn.elu(attention @ h_ref)

    # 1) Precise configuration (f32 matmuls, f32 M stream): tight algorithmic check.
    out_f32 = graph_attention_layer(
        x, adj, M, W, a_self, a_neighs, alpha=alpha, concat=True, row_tile=128,
        matmul_dtype=jnp.float32, m_stream_dtype=jnp.float32)
    out_f32 = jax.block_until_ready(out_f32)
    assert jnp.allclose(out_f32, ref, atol=1e-2, rtol=1e-2), "f32 path mismatch"

    # 2) Fast configuration (bf16 MXU matmuls, int8 adj stream, bf16 M stream):
    #    the performance path recommended for v6e/v7x; the looser tolerance only
    #    bounds bf16 quantisation of M / h / the attention weights (the algorithm
    #    itself is validated tightly above).
    out_fast = graph_attention_layer(
        x, adj, M, W, a_self, a_neighs, alpha=alpha, concat=True, row_tile=128)
    out_fast = jax.block_until_ready(out_fast)
    assert jnp.allclose(out_fast, ref, atol=1e-1, rtol=1e-1), "bf16 path mismatch"

    print("KERNEL_OK")
</pallas_src>

<mosaic_0001>
module attributes {stable_mosaic.version = 11 : i64} {
  func.func @_gat_project_kernel(%arg0: memref<256x64xf32, #tpu.memory_space<vmem>>, %arg1: memref<64x128xf32, #tpu.memory_space<vmem>>, %arg2: memref<128x128xf32, #tpu.memory_space<vmem>>, %arg3: memref<256x128xf32, #tpu.memory_space<vmem>>, %arg4: memref<256x128xf32, #tpu.memory_space<vmem>>) attributes {dimension_semantics = [], scalar_prefetch = 0 : i64, scratch_operands = 0 : i64, tpu.core_type = #tpu.core_type<tc>} {
    %c0 = arith.constant 0 : index
    %c0_0 = arith.constant 0 : index
    %0 = vector.load %arg0[%c0, %c0_0] : memref<256x64xf32, #tpu.memory_space<vmem>>, vector<256x64xf32>
    %c0_1 = arith.constant 0 : index
    %c0_2 = arith.constant 0 : index
    %1 = vector.load %arg1[%c0_1, %c0_2] : memref<64x128xf32, #tpu.memory_space<vmem>>, vector<64x128xf32>
    %cst = arith.constant dense<0.000000e+00> : vector<256x128xf32>
    %2 = tpu.matmul %0, %1, %cst {dimension_numbers = #tpu.dot_dimension_numbers<[1], [0], [0], [1], [0, 0, 1, 1], [], []>} : vector<256x64xf32>, vector<64x128xf32>, vector<256x128xf32> -> vector<256x128xf32>
    %c0_3 = arith.constant 0 : index
    %c0_4 = arith.constant 0 : index
    %3 = vector.load %arg3[%c0_3, %c0_4] : memref<256x128xf32, #tpu.memory_space<vmem>>, vector<256x128xf32>
    tpu.vector_store %arg3[%c0_3, %c0_4], %2 {strides = array<i32>} : memref<256x128xf32, #tpu.memory_space<vmem>>, vector<256x128xf32>,
    %c0_5 = arith.constant 0 : index
    %c0_6 = arith.constant 0 : index
    %4 = vector.load %arg2[%c0_5, %c0_6] : memref<128x128xf32, #tpu.memory_space<vmem>>, vector<128x128xf32>
    %cst_7 = arith.constant dense<0.000000e+00> : vector<256x128xf32>
    %5 = tpu.matmul %2, %4, %cst_7 {dimension_numbers = #tpu.dot_dimension_numbers<[1], [0], [0], [1], [0, 0, 1, 1], [], []>} : vector<256x128xf32>, vector<128x128xf32>, vector<256x128xf32> -> vector<256x128xf32>
    %c0_8 = arith.constant 0 : index
    %c0_9 = arith.constant 0 : index
    %6 = vector.load %arg4[%c0_8, %c0_9] : memref<256x128xf32, #tpu.memory_space<vmem>>, vector<256x128xf32>
    tpu.vector_store %arg4[%c0_8, %c0_9], %5 {strides = array<i32>} : memref<256x128xf32, #tpu.memory_space<vmem>>, vector<256x128xf32>,
    return
  }
}

</mosaic_0001>

<llo_original>
// kernel: tpu_custom_call.1
$region0: #{tpu_custom_call.1}
  #allocation0 [shape = 'u32[]', space=smem, size = 0x4, offset = 0x4, fixed_abs, tag = 'smem constant byte address 0x4 - core index']
  #allocation1 [shape = 'u32[144,128]{1,0:T(1,128)}', space=vmem, size = 0x12000, scoped, tag = 'internal scratch']
  %s0 = inlined_call_operand.vmem [shape: f32[256,64], index: 0, kind: input, shape index: {}]
  %s1 = inlined_call_operand.vmem [shape: f32[64,128], index: 1, kind: input, shape index: {}]
  %s2 = inlined_call_operand.vmem [shape: f32[128,128], index: 2, kind: input, shape index: {}]
  %s3 = inlined_call_operand.hbm [shape: f32[256,128], index: 3, kind: output, shape index: {0}]
  %s4 = inlined_call_operand.hbm [shape: f32[256,128], index: 4, kind: output, shape index: {1}]
  %5 = xla_tuple %s3, %s4
  %s6 = sld [smem:[#allocation0]]
  $region30: #{tpu_custom_call.1} parent=0
    _
  %s8 = ssub.s32 1, %s6
  %s9 = scalar_select 0, %s8, %s6
  $region1: #{tpu_custom_call.1} parent=0
    #allocation2 [shape = 'u8[131072]{0}', space=vmem, size = 0x20000, scoped, tag = 'output window, operand 0, single buffered']
    #allocation3 [shape = 's32[1]{0}', space=sflag, size = 0x4, scoped, tag = 'scoped memory for tpu_custom_call.1']
    #allocation4 [shape = 'u8[131072]{0}', space=vmem, size = 0x20000, scoped, tag = 'output window, operand 1, single buffered']
    #allocation5 [shape = 's32[1]{0}', space=sflag, size = 0x4, scoped, tag = 'scoped memory for tpu_custom_call.1']
    %10 = vsyncpa [#allocation3], 0
    %11 = vsyncpa [#allocation5], 0
    // Predicated region
    $region2: #{tpu_custom_call.1} parent=1 // pred_check
      _
    $region3: #{tpu_custom_call.1} parent=1 // pred_check_branch
      %13 = sbr.rel (0) target = $region5
    $region4: #{tpu_custom_call.1} parent=1 // pred_region
      _
    $region5: #{tpu_custom_call.1} parent=1 // pred_fallthru
      _
    // Predicated region
    $region6: #{tpu_custom_call.1} parent=1 // pred_check
      _
    $region7: #{tpu_custom_call.1} parent=1 // pred_check_branch
      %15 = sbr.rel (0) target = $region9
    $region8: #{tpu_custom_call.1} parent=1 // pred_region
      _
    $region9: #{tpu_custom_call.1} parent=1 // pred_fallthru
      _
    // Predicated region
    $region10: #{tpu_custom_call.1} parent=1 // pred_check
      _
    $region11: #{tpu_custom_call.1} parent=1 // pred_check_branch
      %17 = sbr.rel (0) target = $region13
    $region12: #{tpu_custom_call.1} parent=1 // pred_region
      _
    $region13: #{tpu_custom_call.1} parent=1 // pred_fallthru
      _
    %v18 = vld [vmem:[%s0] sm:$0xff]
    %v19 = vld [vmem:[%s0 + $0x8] sm:$0xff]
    %v20 = vld [vmem:[%s0 + $0x10] sm:$0xff]
    %v21 = vld [vmem:[%s0 + $0x18] sm:$0xff]
    %v22 = vld [vmem:[%s0 + $0x20] sm:$0xff]
    %v23 = vld [vmem:[%s0 + $0x28] sm:$0xff]
    %v24 = vld [vmem:[%s0 + $0x30] sm:$0xff]
    %v25 = vld [vmem:[%s0 + $0x38] sm:$0xff]
    %v26 = vld [vmem:[%s0 + $0x40] sm:$0xff]
    %v27 = vld [vmem:[%s0 + $0x48] sm:$0xff]
    %v28 = vld [vmem:[%s0 + $0x50] sm:$0xff]
    %v29 = vld [vmem:[%s0 + $0x58] sm:$0xff]
    %v30 = vld [vmem:[%s0 + $0x60] sm:$0xff]
    %v31 = vld [vmem:[%s0 + $0x68] sm:$0xff]
    %v32 = vld [vmem:[%s0 + $0x70] sm:$0xff]
    %v33 = vld [vmem:[%s0 + $0x78] sm:$0xff]
    %v34 = vld [vmem:[%s0 + $0x80] sm:$0xff]
    %v35 = vld [vmem:[%s0 + $0x88] sm:$0xff]
    %v36 = vld [vmem:[%s0 + $0x90] sm:$0xff]
    %v37 = vld [vmem:[%s0 + $0x98] sm:$0xff]
    %v38 = vld [vmem:[%s0 + $0xa0] sm:$0xff]
    %v39 = vld [vmem:[%s0 + $0xa8] sm:$0xff]
    %v40 = vld [vmem:[%s0 + $0xb0] sm:$0xff]
    %v41 = vld [vmem:[%s0 + $0xb8] sm:$0xff]
    %v42 = vld [vmem:[%s0 + $0xc0] sm:$0xff]
    %v43 = vld [vmem:[%s0 + $0xc8] sm:$0xff]
    %v44 = vld [vmem:[%s0 + $0xd0] sm:$0xff]
    %v45 = vld [vmem:[%s0 + $0xd8] sm:$0xff]
    %v46 = vld [vmem:[%s0 + $0xe0] sm:$0xff]
    %v47 = vld [vmem:[%s0 + $0xe8] sm:$0xff]
    %v48 = vld [vmem:[%s0 + $0xf0] sm:$0xff]
    %v49 = vld [vmem:[%s0 + $0xf8] sm:$0xff]
    %v50 = vld [vmem:[%s1] sm:$0xff]
    %v51 = vld [vmem:[%s1 + $0x8] sm:$0xff]
    %v52 = vld [vmem:[%s1 + $0x10] sm:$0xff]
    %v53 = vld [vmem:[%s1 + $0x18] sm:$0xff]
    %v54 = vld [vmem:[%s1 + $0x20] sm:$0xff]
    %v55 = vld [vmem:[%s1 + $0x28] sm:$0xff]
    %v56 = vld [vmem:[%s1 + $0x30] sm:$0xff]
    %v57 = vld [vmem:[%s1 + $0x38] sm:$0xff]
    %vm58 = vcmask 523264
    %v60 = vsel %vm58, %v18, 0
    %v63 = vsel %vm58, %v19, 0
    %v66 = vsel %vm58, %v20, 0
    %v69 = vsel %vm58, %v21, 0
    %v72 = vsel %vm58, %v22, 0
    %v75 = vsel %vm58, %v23, 0
    %v78 = vsel %vm58, %v24, 0
    %v81 = vsel %vm58, %v25, 0
    %v84 = vsel %vm58, %v26, 0
    %v87 = vsel %vm58, %v27, 0
    %v90 = vsel %vm58, %v28, 0
    %v93 = vsel %vm58, %v29, 0
    %v96 = vsel %vm58, %v30, 0
    %v99 = vsel %vm58, %v31, 0
    %v102 = vsel %vm58, %v32, 0
    %v105 = vsel %vm58, %v33, 0
    %v108 = vsel %vm58, %v34, 0
    %v111 = vsel %vm58, %v35, 0
    %v114 = vsel %vm58, %v36, 0
    %v117 = vsel %vm58, %v37, 0
    %v120 = vsel %vm58, %v38, 0
    %v123 = vsel %vm58, %v39, 0
    %v126 = vsel %vm58, %v40, 0
    %v129 = vsel %vm58, %v41, 0
    %v132 = vsel %vm58, %v42, 0
    %v135 = vsel %vm58, %v43, 0
    %v138 = vsel %vm58, %v44, 0
    %v141 = vsel %vm58, %v45, 0
    %v144 = vsel %vm58, %v46, 0
    %v147 = vsel %vm58, %v47, 0
    %v150 = vsel %vm58, %v48, 0
    %v153 = vsel %vm58, %v49, 0
    %155 = vmatprep.subr.mxu0 0.0
    %156 = vmatpush1.msra.mxu0 %v50
    %157 = vmatprep.subr.mxu0 0.0
    %158 = vmatpush1.msra.mxu0 %v51
    %159 = vmatprep.subr.mxu0 0.0
    %160 = vmatpush1.msra.mxu0 %v52
    %161 = vmatprep.subr.mxu0 0.0
    %162 = vmatpush1.msra.mxu0 %v53
    %163 = vmatprep.subr.mxu0 0.0
    %164 = vmatpush1.msra.mxu0 %v54
    %165 = vmatprep.subr.mxu0 0.0
    %166 = vmatpush1.msra.mxu0 %v55
    %167 = vmatprep.subr.mxu0 0.0
    %168 = vmatpush1.msra.mxu0 %v56
    %169 = vmatprep.subr.mxu0 0.0
    %170 = vmatpush1.msra.mxu0 %v57
    %171 = vmatprep.subr.mxu0 0.0
    %172 = vmatpush1.msra.mxu0 0.0
    %173 = vmatprep.subr.mxu0 0.0
    %174 = vmatpush1.msra.mxu0 0.0
    %175 = vmatprep.subr.mxu0 0.0
    %176 = vmatpush1.msra.mxu0 0.0
    %177 = vmatprep.subr.mxu0 0.0
    %178 = vmatpush1.msra.mxu0 0.0
    %179 = vmatprep.subr.mxu0 0.0
    %180 = vmatpush1.msra.mxu0 0.0
    %181 = vmatprep.subr.mxu0 0.0
    %182 = vmatpush1.msra.mxu0 0.0
    %183 = vmatprep.subr.mxu0 0.0
    %184 = vmatpush1.msra.mxu0 0.0
    %185 = vmatprep.subr.mxu0 0.0
    %186 = vmatpush1.msra.mxu0 0.0
    %187 = vmatprep.subr.mxu0 0.0
    %188 = vmatpush1.msra.mxu0 0.0
    %189 = vmatprep.subr.mxu0 0.0
    %190 = vmatpush1.msra.mxu0 0.0
    %191 = vmatprep.subr.mxu0 0.0
    %192 = vmatpush1.msra.mxu0 0.0
    %193 = vmatprep.subr.mxu0 0.0
    %194 = vmatpush1.msra.mxu0 0.0
    %195 = vmatprep.subr.mxu0 0.0
    %196 = vmatpush1.msra.mxu0 0.0
    %197 = vmatprep.subr.mxu0 0.0
    %198 = vmatpush1.msra.mxu0 0.0
    %199 = vmatprep.subr.mxu0 0.0
    %200 = vmatpush1.msra.mxu0 0.0
    %201 = vmatprep.subr.mxu0 0.0
    %202 = vmatpush1.msra.mxu0 0.0
    %203 = vmatprep.subr.mxu0 0.0
    %204 = vmatpush1.msra.mxu0 0.0
    %205 = vmatprep.subr.mxu0 0.0
    %206 = vmatpush1.msra.mxu0 0.0
    %207 = vmatprep.subr.mxu0 0.0
    %208 = vmatpush1.msra.mxu0 0.0
    %209 = vmatprep.subr.mxu0 0.0
    %210 = vmatpush1.msra.mxu0 0.0
    %211 = vmatprep.subr.mxu0 0.0
    %212 = vmatpush1.msra.mxu0 0.0
    %213 = vmatprep.subr.mxu0 0.0
    %214 = vmatpush1.msra.mxu0 0.0
    %215 = vmatprep.subr.mxu0 0.0
    %216 = vmatpush1.msra.mxu0 0.0
    %217 = vmatprep.subr.mxu0 0.0
    %218 = vmatpush1.msra.mxu0 0.0
    %219 = vmatprep.mubr.f32.mxu0 0.0
    %220 = vmatmul.mubr.f32.gmra.mrb[0].mxu0 %v60
    %v221 = vpop.f32.mrb[0].mxu0
    %v222 = vadd.f32 0.0, %v221
    %v223 = vpop.f32.mrb[0].mxu0
    %224 = vmatprep.mubr.f32.mxu0 0.0
    %225 = vmatmul.mubr.f32.gmra.mrb[0].mxu0 %v63
    %v226 = vpop.f32.mrb[0].mxu0
    %v227 = vadd.f32 0.0, %v226
    %v228 = vpop.f32.mrb[0].mxu0
    %229 = vmatprep.mubr.f32.mxu0 0.0
    %230 = vmatmul.mubr.f32.gmra.mrb[0].mxu0 %v66
    %v231 = vpop.f32.mrb[0].mxu0
    %v232 = vadd.f32 0.0, %v231
    %v233 = vpop.f32.mrb[0].mxu0
    %234 = vmatprep.mubr.f32.mxu0 0.0
    %235 = vmatmul.mubr.f32.gmra.mrb[0].mxu0 %v69
    %v236 = vpop.f32.mrb[0].mxu0
    %v237 = vadd.f32 0.0, %v236
    %v238 = vpop.f32.mrb[0].mxu0
    %239 = vmatprep.mubr.f32.mxu0 0.0
    %240 = vmatmul.mubr.f32.gmra.mrb[0].mxu0 %v72
    %v241 = vpop.f32.mrb[0].mxu0
    %v242 = vadd.f32 0.0, %v241
    %v243 = vpop.f32.mrb[0].mxu0
    %244 = vmatprep.mubr.f32.mxu0 0.0
    %245 = vmatmul.mubr.f32.gmra.mrb[0].mxu0 %v75
    %v246 = vpop.f32.mrb[0].mxu0
    %v247 = vadd.f32 0.0, %v246
    %v248 = vpop.f32.mrb[0].mxu0
    %249 = vmatprep.mubr.f32.mxu0 0.0
    %250 = vmatmul.mubr.f32.gmra.mrb[0].mxu0 %v78
    %v251 = vpop.f32.mrb[0].mxu0
    %v252 = vadd.f32 0.0, %v251
    %v253 = vpop.f32.mrb[0].mxu0
    %254 = vmatprep.mubr.f32.mxu0 0.0
    %255 = vmatmul.mubr.f32.gmra.mrb[0].mxu0 %v81
    %v256 = vpop.f32.mrb[0].mxu0
    %v257 = vadd.f32 0.0, %v256
    %v258 = vpop.f32.mrb[0].mxu0
    %259 = vmatprep.mubr.f32.mxu0 0.0
    %260 = vmatmul.mubr.f32.gmra.mrb[0].mxu0 %v84
    %v261 = vpop.f32.mrb[0].mxu0
    %v262 = vadd.f32 0.0, %v261
    %v263 = vpop.f32.mrb[0].mxu0
    %264 = vmatprep.mubr.f32.mxu0 0.0
    %265 = vmatmul.mubr.f32.gmra.mrb[0].mxu0 %v87
    %v266 = vpop.f32.mrb[0].mxu0
    %v267 = vadd.f32 0.0, %v266
    %v268 = vpop.f32.mrb[0].mxu0
    %269 = vmatprep.mubr.f32.mxu0 0.0
    %270 = vmatmul.mubr.f32.gmra.mrb[0].mxu0 %v90
    %v271 = vpop.f32.mrb[0].mxu0
    %v272 = vadd.f32 0.0, %v271
    %v273 = vpop.f32.mrb[0].mxu0
    %274 = vmatprep.mubr.f32.mxu0 0.0
    %275 = vmatmul.mubr.f32.gmra.mrb[0].mxu0 %v93
    %v276 = vpop.f32.mrb[0].mxu0
    %v277 = vadd.f32 0.0, %v276
    %v278 = vpop.f32.mrb[0].mxu0
    %279 = vmatprep.mubr.f32.mxu0 0.0
    %280 = vmatmul.mubr.f32.gmra.mrb[0].mxu0 %v96
    %v281 = vpop.f32.mrb[0].mxu0
    %v282 = vadd.f32 0.0, %v281
    %v283 = vpop.f32.mrb[0].mxu0
    %284 = vmatprep.mubr.f32.mxu0 0.0
    %285 = vmatmul.mubr.f32.gmra.mrb[0].mxu0 %v99
    %v286 = vpop.f32.mrb[0].mxu0
    %v287 = vadd.f32 0.0, %v286
    %v288 = vpop.f32.mrb[0].mxu0
    %289 = vmatprep.mubr.f32.mxu0 0.0
    %290 = vmatmul.mubr.f32.gmra.mrb[0].mxu0 %v102
    %v291 = vpop.f32.mrb[0].mxu0
    %v292 = vadd.f32 0.0, %v291
    %v293 = vpop.f32.mrb[0].mxu0
    %294 = vmatprep.mubr.f32.mxu0 0.0
    %295 = vmatmul.mubr.f32.gmra.mrb[0].mxu0 %v105
    %v296 = vpop.f32.mrb[0].mxu0
    %v297 = vadd.f32 0.0, %v296
    %v298 = vpop.f32.mrb[0].mxu0
    %299 = vmatprep.mubr.f32.mxu0 0.0
    %300 = vmatmul.mubr.f32.gmra.mrb[0].mxu0 %v108
    %v301 = vpop.f32.mrb[0].mxu0
    %v302 = vadd.f32 0.0, %v301
    %v303 = vpop.f32.mrb[0].mxu0
    %304 = vmatprep.mubr.f32.mxu0 0.0
    %305 = vmatmul.mubr.f32.gmra.mrb[0].mxu0 %v111
    %v306 = vpop.f32.mrb[0].mxu0
    %v307 = vadd.f32 0.0, %v306
    %v308 = vpop.f32.mrb[0].mxu0
    %309 = vmatprep.mubr.f32.mxu0 0.0
    %310 = vmatmul.mubr.f32.gmra.mrb[0].mxu0 %v114
    %v311 = vpop.f32.mrb[0].mxu0
    %v312 = vadd.f32 0.0, %v311
    %v313 = vpop.f32.mrb[0].mxu0
    %314 = vmatprep.mubr.f32.mxu0 0.0
    %315 = vmatmul.mubr.f32.gmra.mrb[0].mxu0 %v117
    %v316 = vpop.f32.mrb[0].mxu0
    %v317 = vadd.f32 0.0, %v316
    %v318 = vpop.f32.mrb[0].mxu0
    %319 = vmatprep.mubr.f32.mxu0 0.0
    %320 = vmatmul.mubr.f32.gmra.mrb[0].mxu0 %v120
    %v321 = vpop.f32.mrb[0].mxu0
    %v322 = vadd.f32 0.0, %v321
    %v323 = vpop.f32.mrb[0].mxu0
    %324 = vmatprep.mubr.f32.mxu0 0.0
    %325 = vmatmul.mubr.f32.gmra.mrb[0].mxu0 %v123
    %v326 = vpop.f32.mrb[0].mxu0
    %v327 = vadd.f32 0.0, %v326
    %v328 = vpop.f32.mrb[0].mxu0
    %329 = vmatprep.mubr.f32.mxu0 0.0
    %330 = vmatmul.mubr.f32.gmra.mrb[0].mxu0 %v126
    %v331 = vpop.f32.mrb[0].mxu0
    %v332 = vadd.f32 0.0, %v331
    %v333 = vpop.f32.mrb[0].mxu0
    %334 = vmatprep.mubr.f32.mxu0 0.0
    %335 = vmatmul.mubr.f32.gmra.mrb[0].mxu0 %v129
    %v336 = vpop.f32.mrb[0].mxu0
    %v337 = vadd.f32 0.0, %v336
    %v338 = vpop.f32.mrb[0].mxu0
    %339 = vmatprep.mubr.f32.mxu0 0.0
    %340 = vmatmul.mubr.f32.gmra.mrb[0].mxu0 %v132
    %v341 = vpop.f32.mrb[0].mxu0
    %v342 = vadd.f32 0.0, %v341
    %v343 = vpop.f32.mrb[0].mxu0
    %344 = vmatprep.mubr.f32.mxu0 0.0
    %345 = vmatmul.mubr.f32.gmra.mrb[0].mxu0 %v135
    %v346 = vpop.f32.mrb[0].mxu0
    %v347 = vadd.f32 0.0, %v346
    %v348 = vpop.f32.mrb[0].mxu0
    %349 = vmatprep.mubr.f32.mxu0 0.0
    %350 = vmatmul.mubr.f32.gmra.mrb[0].mxu0 %v138
    %v351 = vpop.f32.mrb[0].mxu0
    %v352 = vadd.f32 0.0, %v351
    %v353 = vpop.f32.mrb[0].mxu0
    %354 = vmatprep.mubr.f32.mxu0 0.0
    %355 = vmatmul.mubr.f32.gmra.mrb[0].mxu0 %v141
    %v356 = vpop.f32.mrb[0].mxu0
    %v357 = vadd.f32 0.0, %v356
    %v358 = vpop.f32.mrb[0].mxu0
    %359 = vmatprep.mubr.f32.mxu0 0.0
    %360 = vmatmul.mubr.f32.gmra.mrb[0].mxu0 %v144
    %v361 = vpop.f32.mrb[0].mxu0
    %v362 = vadd.f32 0.0, %v361
    %v363 = vpop.f32.mrb[0].mxu0
    %364 = vmatprep.mubr.f32.mxu0 0.0
    %365 = vmatmul.mubr.f32.gmra.mrb[0].mxu0 %v147
    %v366 = vpop.f32.mrb[0].mxu0
    %v367 = vadd.f32 0.0, %v366
    %v368 = vpop.f32.mrb[0].mxu0
    %369 = vmatprep.mubr.f32.mxu0 0.0
    %370 = vmatmul.mubr.f32.gmra.mrb[0].mxu0 %v150
    %v371 = vpop.f32.mrb[0].mxu0
    %v372 = vadd.f32 0.0, %v371
    %v373 = vpop.f32.mrb[0].mxu0
    %374 = vmatprep.mubr.f32.mxu0 0.0
    %375 = vmatmul.mubr.f32.gmra.mrb[0].mxu0 %v153
    %v376 = vpop.f32.mrb[0].mxu0
    %v377 = vadd.f32 0.0, %v376
    %v378 = vpop.f32.mrb[0].mxu0
    %379 = vdwg.mxu0
    %380 = vst [vmem:[#allocation2] sm:$0xff] %v222
    %381 = vst [vmem:[#allocation2 + $0x8] sm:$0xff] %v227
    %382 = vst [vmem:[#allocation2 + $0x10] sm:$0xff] %v232
    %383 = vst [vmem:[#allocation2 + $0x18] sm:$0xff] %v237
    %384 = vst [vmem:[#allocation2 + $0x20] sm:$0xff] %v242
    %385 = vst [vmem:[#allocation2 + $0x28] sm:$0xff] %v247
    %386 = vst [vmem:[#allocation2 + $0x30] sm:$0xff] %v252
    %387 = vst [vmem:[#allocation2 + $0x38] sm:$0xff] %v257
    %388 = vst [vmem:[#allocation2 + $0x40] sm:$0xff] %v262
    %389 = vst [vmem:[#allocation2 + $0x48] sm:$0xff] %v267
    %390 = vst [vmem:[#allocation2 + $0x50] sm:$0xff] %v272
    %391 = vst [vmem:[#allocation2 + $0x58] sm:$0xff] %v277
    %392 = vst [vmem:[#allocation2 + $0x60] sm:$0xff] %v282
    %393 = vst [vmem:[#allocation2 + $0x68] sm:$0xff] %v287
    %394 = vst [vmem:[#allocation2 + $0x70] sm:$0xff] %v292
    %395 = vst [vmem:[#allocation2 + $0x78] sm:$0xff] %v297
    %396 = vst [vmem:[#allocation2 + $0x80] sm:$0xff] %v302
    %397 = vst [vmem:[#allocation2 + $0x88] sm:$0xff] %v307
    %398 = vst [vmem:[#allocation2 + $0x90] sm:$0xff] %v312
    %399 = vst [vmem:[#allocation2 + $0x98] sm:$0xff] %v317
    %400 = vst [vmem:[#allocation2 + $0xa0] sm:$0xff] %v322
    %401 = vst [vmem:[#allocation2 + $0xa8] sm:$0xff] %v327
    %402 = vst [vmem:[#allocation2 + $0xb0] sm:$0xff] %v332
    %403 = vst [vmem:[#allocation2 + $0xb8] sm:$0xff] %v337
    %404 = vst [vmem:[#allocation2 + $0xc0] sm:$0xff] %v342
    %405 = vst [vmem:[#allocation2 + $0xc8] sm:$0xff] %v347
    %406 = vst [vmem:[#allocation2 + $0xd0] sm:$0xff] %v352
    %407 = vst [vmem:[#allocation2 + $0xd8] sm:$0xff] %v357
    %408 = vst [vmem:[#allocation2 + $0xe0] sm:$0xff] %v362
    %409 = vst [vmem:[#allocation2 + $0xe8] sm:$0xff] %v367
    %410 = vst [vmem:[#allocation2 + $0xf0] sm:$0xff] %v372
    %411 = vst [vmem:[#allocation2 + $0xf8] sm:$0xff] %v377
    %v412 = vld [vmem:[%s2] sm:$0xff]
    %v413 = vld [vmem:[%s2 + $0x8] sm:$0xff]
    %v414 = vld [vmem:[%s2 + $0x10] sm:$0xff]
    %v415 = vld [vmem:[%s2 + $0x18] sm:$0xff]
    %v416 = vld [vmem:[%s2 + $0x20] sm:$0xff]
    %v417 = vld [vmem:[%s2 + $0x28] sm:$0xff]
    %v418 = vld [vmem:[%s2 + $0x30] sm:$0xff]
    %v419 = vld [vmem:[%s2 + $0x38] sm:$0xff]
    %v420 = vld [vmem:[%s2 + $0x40] sm:$0xff]
    %v421 = vld [vmem:[%s2 + $0x48] sm:$0xff]
    %v422 = vld [vmem:[%s2 + $0x50] sm:$0xff]
    %v423 = vld [vmem:[%s2 + $0x58] sm:$0xff]
    %v424 = vld [vmem:[%s2 + $0x60] sm:$0xff]
    %v425 = vld [vmem:[%s2 + $0x68] sm:$0xff]
    %v426 = vld [vmem:[%s2 + $0x70] sm:$0xff]
    %v427 = vld [vmem:[%s2 + $0x78] sm:$0xff]
    %428 = vmatprep.subr.mxu0 0.0
    %429 = vmatpush1.msra.mxu0 %v412
    %430 = vmatprep.subr.mxu0 0.0
    %431 = vmatpush1.msra.mxu0 %v413
    %432 = vmatprep.subr.mxu0 0.0
    %433 = vmatpush1.msra.mxu0 %v414
    %434 = vmatprep.subr.mxu0 0.0
    %435 = vmatpush1.msra.mxu0 %v415
    %436 = vmatprep.subr.mxu0 0.0
    %437 = vmatpush1.msra.mxu0 %v416
    %438 = vmatprep.subr.mxu0 0.0
    %439 = vmatpush1.msra.mxu0 %v417
    %440 = vmatprep.subr.mxu0 0.0
    %441 = vmatpush1.msra.mxu0 %v418
    %442 = vmatprep.subr.mxu0 0.0
    %443 = vmatpush1.msra.mxu0 %v419
    %444 = vmatprep.subr.mxu0 0.0
    %445 = vmatpush1.msra.mxu0 %v420
    %446 = vmatprep.subr.mxu0 0.0
    %447 = vmatpush1.msra.mxu0 %v421
    %448 = vmatprep.subr.mxu0 0.0
    %449 = vmatpush1.msra.mxu0 %v422
    %450 = vmatprep.subr.mxu0 0.0
    %451 = vmatpush1.msra.mxu0 %v423
    %452 = vmatprep.subr.mxu0 0.0
    %453 = vmatpush1.msra.mxu0 %v424
    %454 = vmatprep.subr.mxu0 0.0
    %455 = vmatpush1.msra.mxu0 %v425
    %456 = vmatprep.subr.mxu0 0.0
    %457 = vmatpush1.msra.mxu0 %v426
    %458 = vmatprep.subr.mxu0 0.0
    %459 = vmatpush1.msra.mxu0 %v427
    %460 = vmatprep.subr.mxu0 0.0
    %461 = vmatpush1.msra.mxu0 0.0
    %462 = vmatprep.subr.mxu0 0.0
    %463 = vmatpush1.msra.mxu0 0.0
    %464 = vmatprep.subr.mxu0 0.0
    %465 = vmatpush1.msra.mxu0 0.0
    %466 = vmatprep.subr.mxu0 0.0
    %467 = vmatpush1.msra.mxu0 0.0
    %468 = vmatprep.subr.mxu0 0.0
    %469 = vmatpush1.msra.mxu0 0.0
    %470 = vmatprep.subr.mxu0 0.0
    %471 = vmatpush1.msra.mxu0 0.0
    %472 = vmatprep.subr.mxu0 0.0
    %473 = vmatpush1.msra.mxu0 0.0
    %474 = vmatprep.subr.mxu0 0.0
    %475 = vmatpush1.msra.mxu0 0.0
    %476 = vmatprep.subr.mxu0 0.0
    %477 = vmatpush1.msra.mxu0 0.0
    %478 = vmatprep.subr.mxu0 0.0
    %479 = vmatpush1.msra.mxu0 0.0
    %480 = vmatprep.subr.mxu0 0.0
    %481 = vmatpush1.msra.mxu0 0.0
    %482 = vmatprep.subr.mxu0 0.0
    %483 = vmatpush1.msra.mxu0 0.0
    %484 = vmatprep.subr.mxu0 0.0
    %485 = vmatpush1.msra.mxu0 0.0
    %486 = vmatprep.subr.mxu0 0.0
    %487 = vmatpush1.msra.mxu0 0.0
    %488 = vmatprep.subr.mxu0 0.0
    %489 = vmatpush1.msra.mxu0 0.0
    %490 = vmatprep.subr.mxu0 0.0
    %491 = vmatpush1.msra.mxu0 0.0
    %492 = vmatprep.mubr.f32.mxu0 0.0
    %493 = vmatmul.mubr.f32.gmra.mrb[0].mxu0 %v222
    %v494 = vpop.f32.mrb[0].mxu0
    %v495 = vadd.f32 0.0, %v494
    %v496 = vpop.f32.mrb[0].mxu0
    %497 = vmatprep.mubr.f32.mxu0 0.0
    %498 = vmatmul.mubr.f32.gmra.mrb[0].mxu0 %v227
    %v499 = vpop.f32.mrb[0].mxu0
    %v500 = vadd.f32 0.0, %v499
    %v501 = vpop.f32.mrb[0].mxu0
    %502 = vmatprep.mubr.f32.mxu0 0.0
    %503 = vmatmul.mubr.f32.gmra.mrb[0].mxu0 %v232
    %v504 = vpop.f32.mrb[0].mxu0
    %v505 = vadd.f32 0.0, %v504
    %v506 = vpop.f32.mrb[0].mxu0
    %507 = vmatprep.mubr.f32.mxu0 0.0
    %508 = vmatmul.mubr.f32.gmra.mrb[0].mxu0 %v237
    %v509 = vpop.f32.mrb[0].mxu0
    %v510 = vadd.f32 0.0, %v509
    %v511 = vpop.f32.mrb[0].mxu0
    %512 = vmatprep.mubr.f32.mxu0 0.0
    %513 = vmatmul.mubr.f32.gmra.mrb[0].mxu0 %v242
    %v514 = vpop.f32.mrb[0].mxu0
    %v515 = vadd.f32 0.0, %v514
    %v516 = vpop.f32.mrb[0].mxu0
    %517 = vmatprep.mubr.f32.mxu0 0.0
    %518 = vmatmul.mubr.f32.gmra.mrb[0].mxu0 %v247
    %v519 = vpop.f32.mrb[0].mxu0
    %v520 = vadd.f32 0.0, %v519
    %v521 = vpop.f32.mrb[0].mxu0
    %522 = vmatprep.mubr.f32.mxu0 0.0
    %523 = vmatmul.mubr.f32.gmra.mrb[0].mxu0 %v252
    %v524 = vpop.f32.mrb[0].mxu0
    %v525 = vadd.f32 0.0, %v524
    %v526 = vpop.f32.mrb[0].mxu0
    %527 = vmatprep.mubr.f32.mxu0 0.0
    %528 = vmatmul.mubr.f32.gmra.mrb[0].mxu0 %v257
    %v529 = vpop.f32.mrb[0].mxu0
    %v530 = vadd.f32 0.0, %v529
    %v531 = vpop.f32.mrb[0].mxu0
    %532 = vmatprep.mubr.f32.mxu0 0.0
    %533 = vmatmul.mubr.f32.gmra.mrb[0].mxu0 %v262
    %v534 = vpop.f32.mrb[0].mxu0
    %v535 = vadd.f32 0.0, %v534
    %v536 = vpop.f32.mrb[0].mxu0
    %537 = vmatprep.mubr.f32.mxu0 0.0
    %538 = vmatmul.mubr.f32.gmra.mrb[0].mxu0 %v267
    %v539 = vpop.f32.mrb[0].mxu0
    %v540 = vadd.f32 0.0, %v539
    %v541 = vpop.f32.mrb[0].mxu0
    %542 = vmatprep.mubr.f32.mxu0 0.0
    %543 = vmatmul.mubr.f32.gmra.mrb[0].mxu0 %v272
    %v544 = vpop.f32.mrb[0].mxu0
    %v545 = vadd.f32 0.0, %v544
    %v546 = vpop.f32.mrb[0].mxu0
    %547 = vmatprep.mubr.f32.mxu0 0.0
    %548 = vmatmul.mubr.f32.gmra.mrb[0].mxu0 %v277
    %v549 = vpop.f32.mrb[0].mxu0
    %v550 = vadd.f32 0.0, %v549
    %v551 = vpop.f32.mrb[0].mxu0
    %552 = vmatprep.mubr.f32.mxu0 0.0
    %553 = vmatmul.mubr.f32.gmra.mrb[0].mxu0 %v282
    %v554 = vpop.f32.mrb[0].mxu0
    %v555 = vadd.f32 0.0, %v554
    %v556 = vpop.f32.mrb[0].mxu0
    %557 = vmatprep.mubr.f32.mxu0 0.0
    %558 = vmatmul.mubr.f32.gmra.mrb[0].mxu0 %v287
    %v559 = vpop.f32.mrb[0].mxu0
    %v560 = vadd.f32 0.0, %v559
    %v561 = vpop.f32.mrb[0].mxu0
    %562 = vmatprep.mubr.f32.mxu0 0.0
    %563 = vmatmul.mubr.f32.gmra.mrb[0].mxu0 %v292
    %v564 = vpop.f32.mrb[0].mxu0
    %v565 = vadd.f32 0.0, %v564
    %v566 = vpop.f32.mrb[0].mxu0
    %567 = vmatprep.mubr.f32.mxu0 0.0
    %568 = vmatmul.mubr.f32.gmra.mrb[0].mxu0 %v297
    %v569 = vpop.f32.mrb[0].mxu0
    %v570 = vadd.f32 0.0, %v569
    %v571 = vpop.f32.mrb[0].mxu0
    %572 = vmatprep.mubr.f32.mxu0 0.0
    %573 = vmatmul.mubr.f32.gmra.mrb[0].mxu0 %v302
    %v574 = vpop.f32.mrb[0].mxu0
    %v575 = vadd.f32 0.0, %v574
    %v576 = vpop.f32.mrb[0].mxu0
    %577 = vmatprep.mubr.f32.mxu0 0.0
    %578 = vmatmul.mubr.f32.gmra.mrb[0].mxu0 %v307
    %v579 = vpop.f32.mrb[0].mxu0
    %v580 = vadd.f32 0.0, %v579
    %v581 = vpop.f32.mrb[0].mxu0
    %582 = vmatprep.mubr.f32.mxu0 0.0
    %583 = vmatmul.mubr.f32.gmra.mrb[0].mxu0 %v312
    %v584 = vpop.f32.mrb[0].mxu0
    %v585 = vadd.f32 0.0, %v584
    %v586 = vpop.f32.mrb[0].mxu0
    %587 = vmatprep.mubr.f32.mxu0 0.0
    %588 = vmatmul.mubr.f32.gmra.mrb[0].mxu0 %v317
    %v589 = vpop.f32.mrb[0].mxu0
    %v590 = vadd.f32 0.0, %v589
    %v591 = vpop.f32.mrb[0].mxu0
    %592 = vmatprep.mubr.f32.mxu0 0.0
    %593 = vmatmul.mubr.f32.gmra.mrb[0].mxu0 %v322
    %v594 = vpop.f32.mrb[0].mxu0
    %v595 = vadd.f32 0.0, %v594
    %v596 = vpop.f32.mrb[0].mxu0
    %597 = vmatprep.mubr.f32.mxu0 0.0
    %598 = vmatmul.mubr.f32.gmra.mrb[0].mxu0 %v327
    %v599 = vpop.f32.mrb[0].mxu0
    %v600 = vadd.f32 0.0, %v599
    %v601 = vpop.f32.mrb[0].mxu0
    %602 = vmatprep.mubr.f32.mxu0 0.0
    %603 = vmatmul.mubr.f32.gmra.mrb[0].mxu0 %v332
    %v604 = vpop.f32.mrb[0].mxu0
    %v605 = vadd.f32 0.0, %v604
    %v606 = vpop.f32.mrb[0].mxu0
    %607 = vmatprep.mubr.f32.mxu0 0.0
    %608 = vmatmul.mubr.f32.gmra.mrb[0].mxu0 %v337
    %v609 = vpop.f32.mrb[0].mxu0
    %v610 = vadd.f32 0.0, %v609
    %v611 = vpop.f32.mrb[0].mxu0
    %612 = vmatprep.mubr.f32.mxu0 0.0
    %613 = vmatmul.mubr.f32.gmra.mrb[0].mxu0 %v342
    %v614 = vpop.f32.mrb[0].mxu0
    %v615 = vadd.f32 0.0, %v614
    %v616 = vpop.f32.mrb[0].mxu0
    %617 = vmatprep.mubr.f32.mxu0 0.0
    %618 = vmatmul.mubr.f32.gmra.mrb[0].mxu0 %v347
    %v619 = vpop.f32.mrb[0].mxu0
    %v620 = vadd.f32 0.0, %v619
    %v621 = vpop.f32.mrb[0].mxu0
    %622 = vmatprep.mubr.f32.mxu0 0.0
    %623 = vmatmul.mubr.f32.gmra.mrb[0].mxu0 %v352
    %v624 = vpop.f32.mrb[0].mxu0
    %v625 = vadd.f32 0.0, %v624
    %v626 = vpop.f32.mrb[0].mxu0
    %627 = vmatprep.mubr.f32.mxu0 0.0
    %628 = vmatmul.mubr.f32.gmra.mrb[0].mxu0 %v357
    %v629 = vpop.f32.mrb[0].mxu0
    %v630 = vadd.f32 0.0, %v629
    %v631 = vpop.f32.mrb[0].mxu0
    %632 = vmatprep.mubr.f32.mxu0 0.0
    %633 = vmatmul.mubr.f32.gmra.mrb[0].mxu0 %v362
    %v634 = vpop.f32.mrb[0].mxu0
    %v635 = vadd.f32 0.0, %v634
    %v636 = vpop.f32.mrb[0].mxu0
    %637 = vmatprep.mubr.f32.mxu0 0.0
    %638 = vmatmul.mubr.f32.gmra.mrb[0].mxu0 %v367
    %v639 = vpop.f32.mrb[0].mxu0
    %v640 = vadd.f32 0.0, %v639
    %v641 = vpop.f32.mrb[0].mxu0
    %642 = vmatprep.mubr.f32.mxu0 0.0
    %643 = vmatmul.mubr.f32.gmra.mrb[0].mxu0 %v372
    %v644 = vpop.f32.mrb[0].mxu0
    %v645 = vadd.f32 0.0, %v644
    %v646 = vpop.f32.mrb[0].mxu0
    %647 = vmatprep.mubr.f32.mxu0 0.0
    %648 = vmatmul.mubr.f32.gmra.mrb[0].mxu0 %v377
    %v649 = vpop.f32.mrb[0].mxu0
    %v650 = vadd.f32 0.0, %v649
    %v651 = vpop.f32.mrb[0].mxu0
    %652 = vdwg.mxu0
    %653 = vst [vmem:[#allocation4] sm:$0xff] %v495
    %654 = vst [vmem:[#allocation4 + $0x8] sm:$0xff] %v500
    %655 = vst [vmem:[#allocation4 + $0x10] sm:$0xff] %v505
    %656 = vst [vmem:[#allocation4 + $0x18] sm:$0xff] %v510
    %657 = vst [vmem:[#allocation4 + $0x20] sm:$0xff] %v515
    %658 = vst [vmem:[#allocation4 + $0x28] sm:$0xff] %v520
    %659 = vst [vmem:[#allocation4 + $0x30] sm:$0xff] %v525
    %660 = vst [vmem:[#allocation4 + $0x38] sm:$0xff] %v530
    %661 = vst [vmem:[#allocation4 + $0x40] sm:$0xff] %v535
    %662 = vst [vmem:[#allocation4 + $0x48] sm:$0xff] %v540
    %663 = vst [vmem:[#allocation4 + $0x50] sm:$0xff] %v545
    %664 = vst [vmem:[#allocation4 + $0x58] sm:$0xff] %v550
    %665 = vst [vmem:[#allocation4 + $0x60] sm:$0xff] %v555
    %666 = vst [vmem:[#allocation4 + $0x68] sm:$0xff] %v560
    %667 = vst [vmem:[#allocation4 + $0x70] sm:$0xff] %v565
    %668 = vst [vmem:[#allocation4 + $0x78] sm:$0xff] %v570
    %669 = vst [vmem:[#allocation4 + $0x80] sm:$0xff] %v575
    %670 = vst [vmem:[#allocation4 + $0x88] sm:$0xff] %v580
    %671 = vst [vmem:[#allocation4 + $0x90] sm:$0xff] %v585
    %672 = vst [vmem:[#allocation4 + $0x98] sm:$0xff] %v590
    %673 = vst [vmem:[#allocation4 + $0xa0] sm:$0xff] %v595
    %674 = vst [vmem:[#allocation4 + $0xa8] sm:$0xff] %v600
    %675 = vst [vmem:[#allocation4 + $0xb0] sm:$0xff] %v605
    %676 = vst [vmem:[#allocation4 + $0xb8] sm:$0xff] %v610
    %677 = vst [vmem:[#allocation4 + $0xc0] sm:$0xff] %v615
    %678 = vst [vmem:[#allocation4 + $0xc8] sm:$0xff] %v620
    %679 = vst [vmem:[#allocation4 + $0xd0] sm:$0xff] %v625
    %680 = vst [vmem:[#allocation4 + $0xd8] sm:$0xff] %v630
    %681 = vst [vmem:[#allocation4 + $0xe0] sm:$0xff] %v635
    %682 = vst [vmem:[#allocation4 + $0xe8] sm:$0xff] %v640
    %683 = vst [vmem:[#allocation4 + $0xf0] sm:$0xff] %v645
    %684 = vst [vmem:[#allocation4 + $0xf8] sm:$0xff] %v650
    // Predicated region
    $region14: #{tpu_custom_call.1} parent=1 // pred_check
      _
    $region15: #{tpu_custom_call.1} parent=1 // pred_check_branch
      %686 = sbr.rel (0) target = $region17
    $region16: #{tpu_custom_call.1} parent=1 // pred_region
      %s688 = ssub.s32 4096, 4096
      %689 = vsyncadd [#allocation3], %s688
      %s690 = sshll.u32 [#allocation2], 4
      %s691 = int_to_ptr.vmem [resolvable:$true] %s690
      %696 = dma.vmem_to_hbm [thread:$0]  %s691, 4096, %s3, [#allocation3], 128, 128, 8
    $region17: #{tpu_custom_call.1} parent=1 // pred_fallthru
      _
    // Predicated region
    $region18: #{tpu_custom_call.1} parent=1 // pred_check
      _
    $region19: #{tpu_custom_call.1} parent=1 // pred_check_branch
      %698 = sbr.rel (0) target = $region21
    $region20: #{tpu_custom_call.1} parent=1 // pred_region
      %s700 = ssub.s32 4096, 4096
      %701 = vsyncadd [#allocation5], %s700
      %s702 = sshll.u32 [#allocation4], 4
      %s703 = int_to_ptr.vmem [resolvable:$true] %s702
      %708 = dma.vmem_to_hbm [thread:$0]  %s703, 4096, %s4, [#allocation5], 128, 128, 8
    $region21: #{tpu_custom_call.1} parent=1 // pred_fallthru
      _
    // Predicated region
    $region22: #{tpu_custom_call.1} parent=1 // pred_check
      _
    $region23: #{tpu_custom_call.1} parent=1 // pred_check_branch
      %710 = sbr.rel (0) target = $region25
    $region24: #{tpu_custom_call.1} parent=1 // pred_region
      %711 = dma.done [#allocation3], 4096
    $region25: #{tpu_custom_call.1} parent=1 // pred_fallthru
      _
    // Predicated region
    $region26: #{tpu_custom_call.1} parent=1 // pred_check
      _
    $region27: #{tpu_custom_call.1} parent=1 // pred_check_branch
      %713 = sbr.rel (0) target = $region29
    $region28: #{tpu_custom_call.1} parent=1 // pred_region
      %714 = dma.done [#allocation5], 4096
    $region29: #{tpu_custom_call.1} parent=1 // pred_fallthru
      _
    %715 = vsyncpa [#allocation3], 1
    %716 = vsyncpa [#allocation5], 1

</llo_original>
